<compile_context>
chip_gen: v7x
topology: tpu7x:2x2x1
jax: 0.10.0
libtpu: 0.0.40
codegen_flags: <defaults>
</compile_context>

<pallas_src>
import jax
import jax.numpy as jnp
from jax.experimental import pallas as pl
from jax.experimental.pallas import tpu as pltpu

NUM_FEATURES = 784     # 28*28
NUM_CLASSES = 20       # fc1 out_features (fc2 is unused in forward)
OUT_PAD = 128          # lane-dense padded matmul width (matches MXU N)
OUT_STORE = 32         # stored output width (>= NUM_CLASSES, 4x less DMA than 128)


def fcnet_kernel(x_ref, w_ref, b_ref, mask_ref, o_ref):
    """Fused: fc1 matmul (bf16 MXU, f32 acc) + bias + relu + (eval dropout)
    + additive-masked log_softmax; stores the first OUT_STORE lanes."""
    # Cast in-kernel: avoids a separate wrapper-side cast pass over the
    # bandwidth-binding x stream.
    x = x_ref[...].astype(jnp.bfloat16)              # (TM, 784)
    w = w_ref[...]                                   # (784, 128) bf16, resident
    b = b_ref[...]                                   # (1, 128)  f32, resident

    h = jnp.dot(x, w, preferred_element_type=jnp.float32) + b
    h = jnp.maximum(h, 0.0)                          # relu (dropout = identity
                                                     # in eval; 2nd relu no-op)

    # Padded lanes 20..127 -> -1e30 so they contribute nothing to max / exp-sum.
    h = h + mask_ref[...]                            # (1, 128) {0, -1e30}

    m = jnp.max(h, axis=1, keepdims=True)
    s = h - m
    # NOTE: on v7x, if a trace shows XLU/EUP saturation here, this sum can be
    # routed through the idle MXU (dot with a (128,1) ones column).
    lse = jnp.log(jnp.sum(jnp.exp(s), axis=1, keepdims=True))
    out = s - lse                                    # (TM, 128) f32

    o_ref[...] = out[:, :OUT_STORE].astype(o_ref.dtype)


def prepare_params(w1, b1):
    """One-time (init / param-load time) packing, hoisted off the hot path.

    w1: (784, 20) f32 (pre-transposed for x @ W).  b1: (20,) f32.
    Returns (w1p bf16 (784,128), b1p f32 (1,128), lane_mask f32 (1,128))."""
    w1p = jnp.zeros((NUM_FEATURES, OUT_PAD), jnp.bfloat16)
    w1p = w1p.at[:, :NUM_CLASSES].set(w1.astype(jnp.bfloat16))
    b1p = jnp.zeros((1, OUT_PAD), jnp.float32)
    b1p = b1p.at[0, :NUM_CLASSES].set(b1.astype(jnp.float32))
    lane = jnp.arange(OUT_PAD)
    lane_mask = jnp.where(lane < NUM_CLASSES, 0.0, -1e30)
    lane_mask = lane_mask.astype(jnp.float32).reshape(1, OUT_PAD)
    return w1p, b1p, lane_mask


def _choose_tile(n, block_rows):
    """Tile rows: minimize tail waste, keep a multiple of 8, and give the two
    v7x TensorCores at least one block each when the batch allows it."""
    num_blocks = pl.cdiv(n, block_rows)
    if n > 8:
        num_blocks = max(num_blocks, 2)      # v7x megacore: grid >= 2
    tm = ((pl.cdiv(n, num_blocks) + 7) // 8) * 8
    return max(8, min(tm, ((block_rows + 7) // 8) * 8))


def fcnet_forward(x, w1p, b1p, lane_mask, *, block_rows: int = 4096):
    """x: (N, 1, 28, 28) or (N, 784) float32.
    (w1p, b1p, lane_mask): output of prepare_params().

    Returns (N, 20) float32 log-probabilities.  (The final column slice is
    tiny -- 32 -> 20 lanes -- and normally fuses into the consumer; callers
    that want zero extra passes can consume the raw (N, 32) slab instead.)"""
    n = x.shape[0]
    xf = x.reshape(n, -1)                    # free for contiguous input
    assert xf.shape[1] == NUM_FEATURES, f"expected {NUM_FEATURES} features"

    tm = _choose_tile(n, block_rows)
    grid = (pl.cdiv(n, tm),)                 # ragged last block handled by Pallas

    # VMEM budget: x double-buffer (f32) + resident weights + out double-buffer,
    # plus headroom; capped at 48 MiB so v7x (64 MiB/TC) never overflows.
    vmem_need = (2 * tm * NUM_FEATURES * 4
                 + NUM_FEATURES * OUT_PAD * 2
                 + 2 * 2 * OUT_PAD * 4
                 + 2 * tm * OUT_STORE * 4
                 + (4 << 20))
    vmem_limit = int(min(max(vmem_need, 16 << 20), 48 << 20))

    cost = pl.CostEstimate(
        flops=2 * n * NUM_FEATURES * OUT_PAD,
        transcendentals=n * OUT_PAD,
        bytes_accessed=(n * NUM_FEATURES * 4          # x (f32)
                        + NUM_FEATURES * OUT_PAD * 2  # w1 (bf16)
                        + 2 * OUT_PAD * 4             # b1 + mask (f32)
                        + n * OUT_STORE * 4),         # out (f32, 32-wide)
    )

    out = pl.pallas_call(
        fcnet_kernel,
        out_shape=jax.ShapeDtypeStruct((n, OUT_STORE), jnp.float32),
        grid_spec=pltpu.PrefetchScalarGridSpec(
            num_scalar_prefetch=0,
            grid=grid,
            in_specs=[
                pl.BlockSpec((tm, NUM_FEATURES), lambda i: (i, 0)),
                pl.BlockSpec((NUM_FEATURES, OUT_PAD), lambda i: (0, 0)),
                pl.BlockSpec((1, OUT_PAD), lambda i: (0, 0)),
                pl.BlockSpec((1, OUT_PAD), lambda i: (0, 0)),
            ],
            out_specs=pl.BlockSpec((tm, OUT_STORE), lambda i: (i, 0)),
        ),
        compiler_params=pltpu.CompilerParams(
            dimension_semantics=("parallel",),
            vmem_limit_bytes=vmem_limit,
        ),
        cost_estimate=cost,
    )(xf, w1p, b1p, lane_mask)

    return out[:, :NUM_CLASSES]


def init_params(key):
    """Deterministic init mirroring nn.Linear default U(-1/sqrt(fan_in), +)."""
    k1, k2 = jax.random.split(key, 2)
    bound = 1.0 / jnp.sqrt(float(NUM_FEATURES))
    # Stored pre-transposed as (in_features, out_features) for x @ W.
    w1 = jax.random.uniform(k1, (NUM_FEATURES, NUM_CLASSES), jnp.float32, -bound, bound)
    b1 = jax.random.uniform(k2, (NUM_CLASSES,), jnp.float32, -bound, bound)
    return w1, b1


if __name__ == "__main__":
    key = jax.random.PRNGKey(0)
    kx, kp = jax.random.split(key)

    # Small batch; spatial shape must flatten to 784 to match fc1.
    x = jax.random.normal(kx, (2, 1, 28, 28), jnp.float32)
    w1, b1 = init_params(kp)
    w1p, b1p, lane_mask = prepare_params(w1, b1)      # one-time packing

    out = fcnet_forward(x, w1p, b1p, lane_mask)
    out = jax.block_until_ready(out)

    # Reference in plain JAX with the same bf16-rounded x/W (eval dropout).
    # NOTE: bf16 MXU inputs are a deliberate precision trade vs the f32
    # PyTorch reference (~1e-2-level deviation on log-probs).
    xf32 = x.reshape(2, -1).astype(jnp.bfloat16).astype(jnp.float32)
    wf32 = w1.astype(jnp.bfloat16).astype(jnp.float32)
    h = jnp.maximum(xf32 @ wf32 + b1, 0.0)
    ref = jax.nn.log_softmax(h, axis=1)

    assert out.shape == (2, NUM_CLASSES), out.shape
    assert jnp.all(jnp.isfinite(out)), "non-finite values in kernel output"
    assert jnp.allclose(out, ref, atol=2e-2, rtol=2e-2), (
        float(jnp.max(jnp.abs(out - ref))))

    print("KERNEL_OK")
</pallas_src>

<mosaic_0001>
module attributes {stable_mosaic.version = 11 : i64} {
  func.func @fcnet_kernel(%arg0: i32, %arg1: memref<8x784xf32, #tpu.memory_space<vmem>>, %arg2: memref<784x128xbf16, #tpu.memory_space<vmem>>, %arg3: memref<1x128xf32, #tpu.memory_space<vmem>>, %arg4: memref<1x128xf32, #tpu.memory_space<vmem>>, %arg5: memref<8x32xf32, #tpu.memory_space<vmem>>) attributes {dimension_semantics = [#tpu.dimension_semantics<parallel>], iteration_bounds = array<i64: 1>, scalar_prefetch = 0 : i64, scratch_operands = 0 : i64, tpu.core_type = #tpu.core_type<tc>, window_params = [{transform_indices = @transform_0, window_bounds = array<i64: 8, 784>}, {pipeline_mode = #tpu.pipeline_mode<synchronous>, transform_indices = @transform_1, window_bounds = array<i64: 784, 128>}, {pipeline_mode = #tpu.pipeline_mode<synchronous>, transform_indices = @transform_2, window_bounds = array<i64: 1, 128>}, {pipeline_mode = #tpu.pipeline_mode<synchronous>, transform_indices = @transform_3, window_bounds = array<i64: 1, 128>}, {transform_indices = @transform_4, window_bounds = array<i64: 8, 32>}]} {
    %c0 = arith.constant 0 : index
    %c0_0 = arith.constant 0 : index
    %0 = vector.load %arg1[%c0, %c0_0] : memref<8x784xf32, #tpu.memory_space<vmem>>, vector<8x784xf32>
    %1 = arith.truncf %0 : vector<8x784xf32> to vector<8x784xbf16>
    %c0_1 = arith.constant 0 : index
    %c0_2 = arith.constant 0 : index
    %2 = vector.load %arg2[%c0_1, %c0_2] : memref<784x128xbf16, #tpu.memory_space<vmem>>, vector<784x128xbf16>
    %c0_3 = arith.constant 0 : index
    %c0_4 = arith.constant 0 : index
    %3 = vector.load %arg3[%c0_3, %c0_4] : memref<1x128xf32, #tpu.memory_space<vmem>>, vector<1x128xf32>
    %cst = arith.constant dense<0.000000e+00> : vector<8x128xf32>
    %4 = tpu.matmul %1, %2, %cst {dimension_numbers = #tpu.dot_dimension_numbers<[1], [0], [0], [1], [0, 0, 1, 1], [], []>} : vector<8x784xbf16>, vector<784x128xbf16>, vector<8x128xf32> -> vector<8x128xf32>
    %5 = vector.broadcast %3 : vector<1x128xf32> to vector<8x128xf32>
    %6 = arith.addf %4, %5 : vector<8x128xf32>
    %cst_5 = arith.constant 0.000000e+00 : f32
    %7 = vector.broadcast %cst_5 : f32 to vector<8x128xf32>
    %8 = arith.maximumf %6, %7 : vector<8x128xf32>
    %c0_6 = arith.constant 0 : index
    %c0_7 = arith.constant 0 : index
    %9 = vector.load %arg4[%c0_6, %c0_7] : memref<1x128xf32, #tpu.memory_space<vmem>>, vector<1x128xf32>
    %10 = vector.broadcast %9 : vector<1x128xf32> to vector<8x128xf32>
    %11 = arith.addf %8, %10 : vector<8x128xf32>
    %cst_8 = arith.constant dense<0xFF800000> : vector<8xf32>
    %12 = vector.multi_reduction <maximumf>, %11, %cst_8 [1] : vector<8x128xf32> to vector<8xf32>
    %13 = vector.shape_cast %12 : vector<8xf32> to vector<8x1xf32>
    %14 = vector.broadcast %13 : vector<8x1xf32> to vector<8x128xf32>
    %15 = arith.subf %11, %14 : vector<8x128xf32>
    %16 = math.exp %15 : vector<8x128xf32>
    %cst_9 = arith.constant dense<0.000000e+00> : vector<8xf32>
    %17 = vector.multi_reduction <add>, %16, %cst_9 [1] : vector<8x128xf32> to vector<8xf32>
    %18 = vector.shape_cast %17 : vector<8xf32> to vector<8x1xf32>
    %19 = math.log %18 : vector<8x1xf32>
    %20 = vector.broadcast %19 : vector<8x1xf32> to vector<8x128xf32>
    %21 = arith.subf %15, %20 : vector<8x128xf32>
    %22 = vector.extract_strided_slice %21 {offsets = [0, 0], sizes = [8, 32], strides = [1, 1]} : vector<8x128xf32> to vector<8x32xf32>
    %c0_10 = arith.constant 0 : index
    %c0_11 = arith.constant 0 : index
    %23 = vector.load %arg5[%c0_10, %c0_11] : memref<8x32xf32, #tpu.memory_space<vmem>>, vector<8x32xf32>
    tpu.vector_store %arg5[%c0_10, %c0_11], %22 {strides = array<i32>} : memref<8x32xf32, #tpu.memory_space<vmem>>, vector<8x32xf32>,
    return
  }
  func.func @transform_0(%arg0: i32) -> (i32, i32) {
    %c0_i32 = arith.constant 0 : i32
    %c0_i32_0 = arith.constant 0 : i32
    return %arg0, %c0_i32 : i32, i32
  }
  func.func @transform_1(%arg0: i32) -> (i32, i32) {
    %c0_i32 = arith.constant 0 : i32
    %c0_i32_0 = arith.constant 0 : i32
    %c0_i32_1 = arith.constant 0 : i32
    return %c0_i32, %c0_i32_0 : i32, i32
  }
  func.func @transform_2(%arg0: i32) -> (i32, i32) {
    %c0_i32 = arith.constant 0 : i32
    %c0_i32_0 = arith.constant 0 : i32
    %c0_i32_1 = arith.constant 0 : i32
    return %c0_i32, %c0_i32_0 : i32, i32
  }
  func.func @transform_3(%arg0: i32) -> (i32, i32) {
    %c0_i32 = arith.constant 0 : i32
    %c0_i32_0 = arith.constant 0 : i32
    %c0_i32_1 = arith.constant 0 : i32
    return %c0_i32, %c0_i32_0 : i32, i32
  }
  func.func @transform_4(%arg0: i32) -> (i32, i32) {
    %c0_i32 = arith.constant 0 : i32
    %c0_i32_0 = arith.constant 0 : i32
    return %arg0, %c0_i32 : i32, i32
  }
}

</mosaic_0001>

<llo_original>
// kernel: tpu_custom_call.1
$region0: #{tpu_custom_call.1}
  #allocation0 [shape = 'u32[]', space=smem, size = 0x4, offset = 0x4, fixed_abs, tag = 'smem constant byte address 0x4 - core index']
  #allocation1 [shape = 'u32[144,128]{1,0:T(1,128)}', space=vmem, size = 0x12000, scoped, tag = 'internal scratch']
  %s0 = inlined_call_operand.hbm [shape: f32[2,784], index: 0, kind: input, shape index: {}]
  %s1 = inlined_call_operand.hbm [shape: bf16[784,128], index: 1, kind: input, shape index: {}]
  %s2 = inlined_call_operand.vmem [shape: f32[1,128], index: 2, kind: input, shape index: {}]
  %s3 = inlined_call_operand.vmem [shape: f32[1,128], index: 3, kind: input, shape index: {}]
  %s4 = inlined_call_operand.hbm [shape: f32[2,32], index: 4, kind: output, shape index: {}]
  %s5 = sld [smem:[#allocation0]]
  $region34: #{tpu_custom_call.1} parent=0
    _
  %s7 = ssub.s32 1, %s5
  %s8 = scalar_select 0, %s7, %s5
  $region1: #{tpu_custom_call.1} parent=0
    #allocation2 [shape = 'u8[28672]{0}', space=vmem, size = 0x7000, scoped, tag = 'input window, operand 0, single buffered']
    #allocation3 [shape = 's32[1]{0}', space=sflag, size = 0x4, scoped, tag = 'scoped memory for tpu_custom_call.1']
    #allocation4 [shape = 's32[1]{0}', space=sflag, size = 0x4, scoped, tag = 'scoped memory for tpu_custom_call.1']
    #allocation5 [shape = 'u8[200704]{0}', space=vmem, size = 0x31000, scoped, tag = 'input window, operand 1, single buffered']
    #allocation6 [shape = 's32[1]{0}', space=sflag, size = 0x4, scoped, tag = 'scoped memory for tpu_custom_call.1']
    #allocation7 [shape = 'u8[4096]{0}', space=vmem, size = 0x1000, scoped, tag = 'output window, operand 0, single buffered']
    %9 = vsyncpa [#allocation3], 0
    %10 = vsyncpa [#allocation6], 0
    %11 = vsyncpa [#allocation4], 0
    // Predicated region
    $region2: #{tpu_custom_call.1} parent=1 // pred_check
      _
    $region3: #{tpu_custom_call.1} parent=1 // pred_check_branch
      %13 = sbr.rel (0) target = $region5
    $region4: #{tpu_custom_call.1} parent=1 // pred_region
      %s15 = ssub.s32 896, 224
      %16 = vsyncadd [#allocation3], %s15
      %s17 = sshll.u32 [#allocation2], 4
      %s18 = int_to_ptr.vmem [resolvable:$true] %s17
      %23 = dma.hbm_to_vmem [thread:$0]  %s0, 224, %s18, [#allocation3], 224, 224, 14
    $region5: #{tpu_custom_call.1} parent=1 // pred_fallthru
      _
    // Predicated region
    $region6: #{tpu_custom_call.1} parent=1 // pred_check
      _
    $region7: #{tpu_custom_call.1} parent=1 // pred_check_branch
      %25 = sbr.rel (0) target = $region9
    $region8: #{tpu_custom_call.1} parent=1 // pred_region
      %s27 = ssub.s32 6272, 6272
      %28 = vsyncadd [#allocation6], %s27
      %s29 = sshll.u32 [#allocation5], 4
      %s30 = int_to_ptr.vmem [resolvable:$true] %s29
      %35 = dma.hbm_to_vmem [thread:$0]  %s1, 6272, %s30, [#allocation6], 64, 64, 4
    $region9: #{tpu_custom_call.1} parent=1 // pred_fallthru
      _
    // Predicated region
    $region10: #{tpu_custom_call.1} parent=1 // pred_check
      _
    $region11: #{tpu_custom_call.1} parent=1 // pred_check_branch
      %37 = sbr.rel (0) target = $region13
    $region12: #{tpu_custom_call.1} parent=1 // pred_region
      _
    $region13: #{tpu_custom_call.1} parent=1 // pred_fallthru
      _
    // Predicated region
    $region14: #{tpu_custom_call.1} parent=1 // pred_check
      _
    $region15: #{tpu_custom_call.1} parent=1 // pred_check_branch
      %39 = sbr.rel (0) target = $region17
    $region16: #{tpu_custom_call.1} parent=1 // pred_region
      _
    $region17: #{tpu_custom_call.1} parent=1 // pred_fallthru
      _
    // Predicated region
    $region18: #{tpu_custom_call.1} parent=1 // pred_check
      _
    $region19: #{tpu_custom_call.1} parent=1 // pred_check_branch
      %41 = sbr.rel (0) target = $region21
    $region20: #{tpu_custom_call.1} parent=1 // pred_region
      %42 = dma.done [#allocation3], 896
    $region21: #{tpu_custom_call.1} parent=1 // pred_fallthru
      _
    // Predicated region
    $region22: #{tpu_custom_call.1} parent=1 // pred_check
      _
    $region23: #{tpu_custom_call.1} parent=1 // pred_check_branch
      %44 = sbr.rel (0) target = $region25
    $region24: #{tpu_custom_call.1} parent=1 // pred_region
      %45 = dma.done [#allocation6], 6272
    $region25: #{tpu_custom_call.1} parent=1 // pred_fallthru
      _
    %v47 = vld [vmem:[#allocation2] sm:$0xff]
    %v48 = vld [vmem:[#allocation2 + $0x8] sm:$0x3f]
    %v49 = vld [vmem:[#allocation2 + $0xe] sm:$0xff]
    %v50 = vld [vmem:[#allocation2 + $0x16] sm:$0x3f]
    %v51 = vld [vmem:[#allocation2 + $0x1c] sm:$0xff]
    %v52 = vld [vmem:[#allocation2 + $0x24] sm:$0x3f]
    %v53 = vld [vmem:[#allocation2 + $0x2a] sm:$0xff]
    %v54 = vld [vmem:[#allocation2 + $0x32] sm:$0x3f]
    %v63 = vcombine.low %v47, %v49
    %v64 = vcombine.high %v47, %v49
    %v65 = vcombine.low %v51, %v53
    %v66 = vcombine.high %v51, %v53
    %v68 = vunpack.c.l.s4 1983009808
    %v69 = vunpack.c.0.s8 %v68
    %v70 = vlaneseq
    %v71 = vshrl.u32 %v70, 7
    %v72 = vsub.s32 %v69, %v71
    %v73 = vrot.slane %v63, %v72
    %v75 = vunpack.c.l.s4 1983009808
    %v76 = vunpack.c.0.s8 %v75
    %v77 = vlaneseq
    %v78 = vshrl.u32 %v77, 7
    %v79 = vsub.s32 %v76, %v78
    %v80 = vrot.slane %v64, %v79
    %v82 = vunpack.c.l.s4 1983009808
    %v83 = vunpack.c.0.s8 %v82
    %v84 = vlaneseq
    %v85 = vshrl.u32 %v84, 7
    %v86 = vsub.s32 %v83, %v85
    %v87 = vrot.slane %v65, %v86
    %v89 = vunpack.c.l.s4 1983009808
    %v90 = vunpack.c.0.s8 %v89
    %v91 = vlaneseq
    %v92 = vshrl.u32 %v91, 7
    %v93 = vsub.s32 %v90, %v92
    %v94 = vrot.slane %v66, %v93
    %v95 = vcombine.low %v73, %v87
    %v96 = vcombine.high %v73, %v87
    %v97 = vcombine.low %v80, %v94
    %v98 = vcombine.high %v80, %v94
    %v99 = vcombine.low %v48, %v50
    %v100 = vcombine.high %v48, %v50
    %v101 = vcombine.low %v52, %v54
    %v102 = vcombine.high %v52, %v54
    %v104 = vunpack.c.l.s4 1983009808
    %v105 = vunpack.c.0.s8 %v104
    %v106 = vlaneseq
    %v107 = vshrl.u32 %v106, 7
    %v108 = vsub.s32 %v105, %v107
    %v109 = vrot.slane %v99, %v108
    %v111 = vunpack.c.l.s4 1983009808
    %v112 = vunpack.c.0.s8 %v111
    %v113 = vlaneseq
    %v114 = vshrl.u32 %v113, 7
    %v115 = vsub.s32 %v112, %v114
    %v116 = vrot.slane %v100, %v115
    %v118 = vunpack.c.l.s4 1983009808
    %v119 = vunpack.c.0.s8 %v118
    %v120 = vlaneseq
    %v121 = vshrl.u32 %v120, 7
    %v122 = vsub.s32 %v119, %v121
    %v123 = vrot.slane %v101, %v122
    %v125 = vunpack.c.l.s4 1983009808
    %v126 = vunpack.c.0.s8 %v125
    %v127 = vlaneseq
    %v128 = vshrl.u32 %v127, 7
    %v129 = vsub.s32 %v126, %v128
    %v130 = vrot.slane %v102, %v129
    %v131 = vcombine.low %v109, %v123
    %v132 = vcombine.high %v109, %v123
    %v133 = vcombine.low %v116, %v130
    %v141 = vpack.c.bf16 %v95, %v95
    %v142 = vpack.c.bf16 %v96, %v96
    %v143 = vpack.c.bf16 %v97, %v97
    %v144 = vpack.c.bf16 %v98, %v98
    %v145 = vpack.c.bf16 %v131, %v131
    %v146 = vpack.c.bf16 %v132, %v132
    %v147 = vpack.c.bf16 %v133, %v133
    %v148 = vld [vmem:[#allocation5] sm:$0xf]
    %v149 = vld [vmem:[#allocation5 + $0x4] sm:$0xf]
    %v150 = vld [vmem:[#allocation5 + $0x8] sm:$0xf]
    %v151 = vld [vmem:[#allocation5 + $0xc] sm:$0xf]
    %v152 = vld [vmem:[#allocation5 + $0x10] sm:$0xf]
    %v153 = vld [vmem:[#allocation5 + $0x14] sm:$0xf]
    %v154 = vld [vmem:[#allocation5 + $0x18] sm:$0xf]
    %v155 = vld [vmem:[#allocation5 + $0x1c] sm:$0xf]
    %v156 = vld [vmem:[#allocation5 + $0x20] sm:$0xf]
    %v157 = vld [vmem:[#allocation5 + $0x24] sm:$0xf]
    %v158 = vld [vmem:[#allocation5 + $0x28] sm:$0xf]
    %v159 = vld [vmem:[#allocation5 + $0x2c] sm:$0xf]
    %v160 = vld [vmem:[#allocation5 + $0x30] sm:$0xf]
    %v161 = vld [vmem:[#allocation5 + $0x34] sm:$0xf]
    %v162 = vld [vmem:[#allocation5 + $0x38] sm:$0xf]
    %v163 = vld [vmem:[#allocation5 + $0x3c] sm:$0xf]
    %v164 = vld [vmem:[#allocation5 + $0x40] sm:$0xf]
    %v165 = vld [vmem:[#allocation5 + $0x44] sm:$0xf]
    %v166 = vld [vmem:[#allocation5 + $0x48] sm:$0xf]
    %v167 = vld [vmem:[#allocation5 + $0x4c] sm:$0xf]
    %v168 = vld [vmem:[#allocation5 + $0x50] sm:$0xf]
    %v169 = vld [vmem:[#allocation5 + $0x54] sm:$0xf]
    %v170 = vld [vmem:[#allocation5 + $0x58] sm:$0xf]
    %v171 = vld [vmem:[#allocation5 + $0x5c] sm:$0xf]
    %v172 = vld [vmem:[#allocation5 + $0x60] sm:$0xf]
    %v173 = vld [vmem:[#allocation5 + $0x64] sm:$0xf]
    %v174 = vld [vmem:[#allocation5 + $0x68] sm:$0xf]
    %v175 = vld [vmem:[#allocation5 + $0x6c] sm:$0xf]
    %v176 = vld [vmem:[#allocation5 + $0x70] sm:$0xf]
    %v177 = vld [vmem:[#allocation5 + $0x74] sm:$0xf]
    %v178 = vld [vmem:[#allocation5 + $0x78] sm:$0xf]
    %v179 = vld [vmem:[#allocation5 + $0x7c] sm:$0xf]
    %v180 = vld [vmem:[#allocation5 + $0x80] sm:$0xf]
    %v181 = vld [vmem:[#allocation5 + $0x84] sm:$0xf]
    %v182 = vld [vmem:[#allocation5 + $0x88] sm:$0xf]
    %v183 = vld [vmem:[#allocation5 + $0x8c] sm:$0xf]
    %v184 = vld [vmem:[#allocation5 + $0x90] sm:$0xf]
    %v185 = vld [vmem:[#allocation5 + $0x94] sm:$0xf]
    %v186 = vld [vmem:[#allocation5 + $0x98] sm:$0xf]
    %v187 = vld [vmem:[#allocation5 + $0x9c] sm:$0xf]
    %v188 = vld [vmem:[#allocation5 + $0xa0] sm:$0xf]
    %v189 = vld [vmem:[#allocation5 + $0xa4] sm:$0xf]
    %v190 = vld [vmem:[#allocation5 + $0xa8] sm:$0xf]
    %v191 = vld [vmem:[#allocation5 + $0xac] sm:$0xf]
    %v192 = vld [vmem:[#allocation5 + $0xb0] sm:$0xf]
    %v193 = vld [vmem:[#allocation5 + $0xb4] sm:$0xf]
    %v194 = vld [vmem:[#allocation5 + $0xb8] sm:$0xf]
    %v195 = vld [vmem:[#allocation5 + $0xbc] sm:$0xf]
    %v196 = vld [vmem:[#allocation5 + $0xc0] sm:$0xf]
    %v197 = vld [vmem:[#allocation5 + $0xc4] sm:$0xf]
    %v198 = vld [vmem:[#allocation5 + $0xc8] sm:$0xf]
    %v199 = vld [vmem:[#allocation5 + $0xcc] sm:$0xf]
    %v200 = vld [vmem:[#allocation5 + $0xd0] sm:$0xf]
    %v201 = vld [vmem:[#allocation5 + $0xd4] sm:$0xf]
    %v202 = vld [vmem:[#allocation5 + $0xd8] sm:$0xf]
    %v203 = vld [vmem:[#allocation5 + $0xdc] sm:$0xf]
    %v204 = vld [vmem:[#allocation5 + $0xe0] sm:$0xf]
    %v205 = vld [vmem:[#allocation5 + $0xe4] sm:$0xf]
    %v206 = vld [vmem:[#allocation5 + $0xe8] sm:$0xf]
    %v207 = vld [vmem:[#allocation5 + $0xec] sm:$0xf]
    %v208 = vld [vmem:[#allocation5 + $0xf0] sm:$0xf]
    %v209 = vld [vmem:[#allocation5 + $0xf4] sm:$0xf]
    %v210 = vld [vmem:[#allocation5 + $0xf8] sm:$0xf]
    %v211 = vld [vmem:[#allocation5 + $0xfc] sm:$0xf]
    %v212 = vld [vmem:[#allocation5 + $0x100] sm:$0xf]
    %v213 = vld [vmem:[#allocation5 + $0x104] sm:$0xf]
    %v214 = vld [vmem:[#allocation5 + $0x108] sm:$0xf]
    %v215 = vld [vmem:[#allocation5 + $0x10c] sm:$0xf]
    %v216 = vld [vmem:[#allocation5 + $0x110] sm:$0xf]
    %v217 = vld [vmem:[#allocation5 + $0x114] sm:$0xf]
    %v218 = vld [vmem:[#allocation5 + $0x118] sm:$0xf]
    %v219 = vld [vmem:[#allocation5 + $0x11c] sm:$0xf]
    %v220 = vld [vmem:[#allocation5 + $0x120] sm:$0xf]
    %v221 = vld [vmem:[#allocation5 + $0x124] sm:$0xf]
    %v222 = vld [vmem:[#allocation5 + $0x128] sm:$0xf]
    %v223 = vld [vmem:[#allocation5 + $0x12c] sm:$0xf]
    %v224 = vld [vmem:[#allocation5 + $0x130] sm:$0xf]
    %v225 = vld [vmem:[#allocation5 + $0x134] sm:$0xf]
    %v226 = vld [vmem:[#allocation5 + $0x138] sm:$0xf]
    %v227 = vld [vmem:[#allocation5 + $0x13c] sm:$0xf]
    %v228 = vld [vmem:[#allocation5 + $0x140] sm:$0xf]
    %v229 = vld [vmem:[#allocation5 + $0x144] sm:$0xf]
    %v230 = vld [vmem:[#allocation5 + $0x148] sm:$0xf]
    %v231 = vld [vmem:[#allocation5 + $0x14c] sm:$0xf]
    %v232 = vld [vmem:[#allocation5 + $0x150] sm:$0xf]
    %v233 = vld [vmem:[#allocation5 + $0x154] sm:$0xf]
    %v234 = vld [vmem:[#allocation5 + $0x158] sm:$0xf]
    %v235 = vld [vmem:[#allocation5 + $0x15c] sm:$0xf]
    %v236 = vld [vmem:[#allocation5 + $0x160] sm:$0xf]
    %v237 = vld [vmem:[#allocation5 + $0x164] sm:$0xf]
    %v238 = vld [vmem:[#allocation5 + $0x168] sm:$0xf]
    %v239 = vld [vmem:[#allocation5 + $0x16c] sm:$0xf]
    %v240 = vld [vmem:[#allocation5 + $0x170] sm:$0xf]
    %v241 = vld [vmem:[#allocation5 + $0x174] sm:$0xf]
    %v242 = vld [vmem:[#allocation5 + $0x178] sm:$0xf]
    %v243 = vld [vmem:[#allocation5 + $0x17c] sm:$0xf]
    %v244 = vld [vmem:[#allocation5 + $0x180] sm:$0xf]
    %v245 = vld [vmem:[#allocation5 + $0x184] sm:$0xf]
    %v246 = vld [vmem:[%s2] sm:$0x1]
    %v248 = vlaneseq
    %v249 = vshrl.u32 %v248, 7
    %v250 = vsub.s32 0, %v249
    %v251 = vrot.slane %v246, %v250
    %v351 = vunpack.c.l.b16 %v148
    %v352 = vunpack.c.l.b16 %v149
    %v353 = vunpack.c.l.b16 %v150
    %v354 = vunpack.c.l.b16 %v151
    %v355 = vunpack.c.l.b16 %v152
    %v356 = vunpack.c.l.b16 %v153
    %v357 = vunpack.c.l.b16 %v154
    %v358 = vunpack.c.l.b16 %v155
    %v359 = vunpack.c.l.b16 %v156
    %v360 = vunpack.c.l.b16 %v157
    %v361 = vunpack.c.l.b16 %v158
    %v362 = vunpack.c.l.b16 %v159
    %v363 = vunpack.c.l.b16 %v160
    %v364 = vunpack.c.l.b16 %v161
    %v365 = vunpack.c.l.b16 %v162
    %v366 = vunpack.c.l.b16 %v163
    %v367 = vunpack.c.l.b16 %v164
    %v368 = vunpack.c.l.b16 %v165
    %v369 = vunpack.c.l.b16 %v166
    %v370 = vunpack.c.l.b16 %v167
    %v371 = vunpack.c.l.b16 %v168
    %v372 = vunpack.c.l.b16 %v169
    %v373 = vunpack.c.l.b16 %v170
    %v374 = vunpack.c.l.b16 %v171
    %v375 = vunpack.c.l.b16 %v172
    %v376 = vunpack.c.l.b16 %v173
    %v377 = vunpack.c.l.b16 %v174
    %v378 = vunpack.c.l.b16 %v175
    %v379 = vunpack.c.l.b16 %v176
    %v380 = vunpack.c.l.b16 %v177
    %v381 = vunpack.c.l.b16 %v178
    %v382 = vunpack.c.l.b16 %v179
    %v383 = vunpack.c.l.b16 %v180
    %v384 = vunpack.c.l.b16 %v181
    %v385 = vunpack.c.l.b16 %v182
    %v386 = vunpack.c.l.b16 %v183
    %v387 = vunpack.c.l.b16 %v184
    %v388 = vunpack.c.l.b16 %v185
    %v389 = vunpack.c.l.b16 %v186
    %v390 = vunpack.c.l.b16 %v187
    %v391 = vunpack.c.l.b16 %v188
    %v392 = vunpack.c.l.b16 %v189
    %v393 = vunpack.c.l.b16 %v190
    %v394 = vunpack.c.l.b16 %v191
    %v395 = vunpack.c.l.b16 %v192
    %v396 = vunpack.c.l.b16 %v193
    %v397 = vunpack.c.l.b16 %v194
    %v398 = vunpack.c.l.b16 %v195
    %v399 = vunpack.c.l.b16 %v196
    %v400 = vunpack.c.l.b16 %v197
    %v401 = vunpack.c.l.b16 %v198
    %v402 = vunpack.c.l.b16 %v199
    %v403 = vunpack.c.l.b16 %v200
    %v404 = vunpack.c.l.b16 %v201
    %v405 = vunpack.c.l.b16 %v202
    %v406 = vunpack.c.l.b16 %v203
    %v407 = vunpack.c.l.b16 %v204
    %v408 = vunpack.c.l.b16 %v205
    %v409 = vunpack.c.l.b16 %v206
    %v410 = vunpack.c.l.b16 %v207
    %v411 = vunpack.c.l.b16 %v208
    %v412 = vunpack.c.l.b16 %v209
    %v413 = vunpack.c.l.b16 %v210
    %v414 = vunpack.c.l.b16 %v211
    %v415 = vunpack.c.l.b16 %v212
    %v416 = vunpack.c.l.b16 %v213
    %v417 = vunpack.c.l.b16 %v214
    %v418 = vunpack.c.l.b16 %v215
    %v419 = vunpack.c.l.b16 %v216
    %v420 = vunpack.c.l.b16 %v217
    %v421 = vunpack.c.l.b16 %v218
    %v422 = vunpack.c.l.b16 %v219
    %v423 = vunpack.c.l.b16 %v220
    %v424 = vunpack.c.l.b16 %v221
    %v425 = vunpack.c.l.b16 %v222
    %v426 = vunpack.c.l.b16 %v223
    %v427 = vunpack.c.l.b16 %v224
    %v428 = vunpack.c.l.b16 %v225
    %v429 = vunpack.c.l.b16 %v226
    %v430 = vunpack.c.l.b16 %v227
    %v431 = vunpack.c.l.b16 %v228
    %v432 = vunpack.c.l.b16 %v229
    %v433 = vunpack.c.l.b16 %v230
    %v434 = vunpack.c.l.b16 %v231
    %v435 = vunpack.c.l.b16 %v232
    %v436 = vunpack.c.l.b16 %v233
    %v437 = vunpack.c.l.b16 %v234
    %v438 = vunpack.c.l.b16 %v235
    %v439 = vunpack.c.l.b16 %v236
    %v440 = vunpack.c.l.b16 %v237
    %v441 = vunpack.c.l.b16 %v238
    %v442 = vunpack.c.l.b16 %v239
    %v443 = vunpack.c.l.b16 %v240
    %v444 = vunpack.c.l.b16 %v241
    %v445 = vunpack.c.l.b16 %v242
    %v446 = vunpack.c.l.b16 %v243
    %v447 = vunpack.c.l.b16 %v244
    %v448 = vunpack.c.l.b16 %v245
    %v449 = vpack.c.b16 %v352, %v351
    %v450 = vpack.c.b16 %v354, %v353
    %v451 = vpack.c.b16 %v356, %v355
    %v452 = vpack.c.b16 %v358, %v357
    %v453 = vpack.c.b16 %v360, %v359
    %v454 = vpack.c.b16 %v362, %v361
    %v455 = vpack.c.b16 %v364, %v363
    %v456 = vpack.c.b16 %v366, %v365
    %v457 = vpack.c.b16 %v368, %v367
    %v458 = vpack.c.b16 %v370, %v369
    %v459 = vpack.c.b16 %v372, %v371
    %v460 = vpack.c.b16 %v374, %v373
    %v461 = vpack.c.b16 %v376, %v375
    %v462 = vpack.c.b16 %v378, %v377
    %v463 = vpack.c.b16 %v380, %v379
    %v464 = vpack.c.b16 %v382, %v381
    %v465 = vpack.c.b16 %v384, %v383
    %v466 = vpack.c.b16 %v386, %v385
    %v467 = vpack.c.b16 %v388, %v387
    %v468 = vpack.c.b16 %v390, %v389
    %v469 = vpack.c.b16 %v392, %v391
    %v470 = vpack.c.b16 %v394, %v393
    %v471 = vpack.c.b16 %v396, %v395
    %v472 = vpack.c.b16 %v398, %v397
    %v473 = vpack.c.b16 %v400, %v399
    %v474 = vpack.c.b16 %v402, %v401
    %v475 = vpack.c.b16 %v404, %v403
    %v476 = vpack.c.b16 %v406, %v405
    %v477 = vpack.c.b16 %v408, %v407
    %v478 = vpack.c.b16 %v410, %v409
    %v479 = vpack.c.b16 %v412, %v411
    %v480 = vpack.c.b16 %v414, %v413
    %v481 = vpack.c.b16 %v416, %v415
    %v482 = vpack.c.b16 %v418, %v417
    %v483 = vpack.c.b16 %v420, %v419
    %v484 = vpack.c.b16 %v422, %v421
    %v485 = vpack.c.b16 %v424, %v423
    %v486 = vpack.c.b16 %v426, %v425
    %v487 = vpack.c.b16 %v428, %v427
    %v488 = vpack.c.b16 %v430, %v429
    %v489 = vpack.c.b16 %v432, %v431
    %v490 = vpack.c.b16 %v434, %v433
    %v491 = vpack.c.b16 %v436, %v435
    %v492 = vpack.c.b16 %v438, %v437
    %v493 = vpack.c.b16 %v440, %v439
    %v494 = vpack.c.b16 %v442, %v441
    %v495 = vpack.c.b16 %v444, %v443
    %v496 = vpack.c.b16 %v446, %v445
    %v497 = vpack.c.b16 %v448, %v447
    %vm547 = vcmask 130048
    %v549 = vsel %vm547, %v147, 0
    %551 = vmatprep.subr.bf16.mxu0 0
    %552 = vmatpush1.bf16.msra.mxu0 %v449
    %553 = vmatprep.subr.bf16.mxu0 0
    %554 = vmatpush1.bf16.msra.mxu0 %v450
    %555 = vmatprep.subr.bf16.mxu0 0
    %556 = vmatpush1.bf16.msra.mxu0 %v451
    %557 = vmatprep.subr.bf16.mxu0 0
    %558 = vmatpush1.bf16.msra.mxu0 %v452
    %559 = vmatprep.subr.bf16.mxu0 0
    %560 = vmatpush1.bf16.msra.mxu0 %v453
    %561 = vmatprep.subr.bf16.mxu0 0
    %562 = vmatpush1.bf16.msra.mxu0 %v454
    %563 = vmatprep.subr.bf16.mxu0 0
    %564 = vmatpush1.bf16.msra.mxu0 %v455
    %565 = vmatprep.subr.bf16.mxu0 0
    %566 = vmatpush1.bf16.msra.mxu0 %v456
    %567 = vmatprep.subr.bf16.mxu0 0
    %568 = vmatpush1.bf16.msra.mxu0 %v457
    %569 = vmatprep.subr.bf16.mxu0 0
    %570 = vmatpush1.bf16.msra.mxu0 %v458
    %571 = vmatprep.subr.bf16.mxu0 0
    %572 = vmatpush1.bf16.msra.mxu0 %v459
    %573 = vmatprep.subr.bf16.mxu0 0
    %574 = vmatpush1.bf16.msra.mxu0 %v460
    %575 = vmatprep.subr.bf16.mxu0 0
    %576 = vmatpush1.bf16.msra.mxu0 %v461
    %577 = vmatprep.subr.bf16.mxu0 0
    %578 = vmatpush1.bf16.msra.mxu0 %v462
    %579 = vmatprep.subr.bf16.mxu0 0
    %580 = vmatpush1.bf16.msra.mxu0 %v463
    %581 = vmatprep.subr.bf16.mxu0 0
    %582 = vmatpush1.bf16.msra.mxu0 %v464
    %583 = vmatprep.mubr.bf16.mxu0 %v142
    %584 = vmatmul.mubr.bf16.gmra.mrb[0].mxu0 %v141
    %v585 = vpop.f32.mrb[0].mxu0
    %v586 = vadd.f32 %v251, %v585
    %v587 = vpop.f32.mrb[0].mxu0
    %v588 = vpop.f32.mrb[0].mxu0
    %v589 = vpop.f32.mrb[0].mxu0
    %590 = vdwg.mxu0
    %591 = vmatprep.subr.bf16.mxu0 0
    %592 = vmatpush1.bf16.msra.mxu0 %v465
    %593 = vmatprep.subr.bf16.mxu0 0
    %594 = vmatpush1.bf16.msra.mxu0 %v466
    %595 = vmatprep.subr.bf16.mxu0 0
    %596 = vmatpush1.bf16.msra.mxu0 %v467
    %597 = vmatprep.subr.bf16.mxu0 0
    %598 = vmatpush1.bf16.msra.mxu0 %v468
    %599 = vmatprep.subr.bf16.mxu0 0
    %600 = vmatpush1.bf16.msra.mxu0 %v469
    %601 = vmatprep.subr.bf16.mxu0 0
    %602 = vmatpush1.bf16.msra.mxu0 %v470
    %603 = vmatprep.subr.bf16.mxu0 0
    %604 = vmatpush1.bf16.msra.mxu0 %v471
    %605 = vmatprep.subr.bf16.mxu0 0
    %606 = vmatpush1.bf16.msra.mxu0 %v472
    %607 = vmatprep.subr.bf16.mxu0 0
    %608 = vmatpush1.bf16.msra.mxu0 %v473
    %609 = vmatprep.subr.bf16.mxu0 0
    %610 = vmatpush1.bf16.msra.mxu0 %v474
    %611 = vmatprep.subr.bf16.mxu0 0
    %612 = vmatpush1.bf16.msra.mxu0 %v475
    %613 = vmatprep.subr.bf16.mxu0 0
    %614 = vmatpush1.bf16.msra.mxu0 %v476
    %615 = vmatprep.subr.bf16.mxu0 0
    %616 = vmatpush1.bf16.msra.mxu0 %v477
    %617 = vmatprep.subr.bf16.mxu0 0
    %618 = vmatpush1.bf16.msra.mxu0 %v478
    %619 = vmatprep.subr.bf16.mxu0 0
    %620 = vmatpush1.bf16.msra.mxu0 %v479
    %621 = vmatprep.subr.bf16.mxu0 0
    %622 = vmatpush1.bf16.msra.mxu0 %v480
    %623 = vmatprep.mubr.bf16.mxu0 %v144
    %624 = vmatmul.mubr.bf16.gmra.mrb[0].mxu0 %v143
    %v625 = vpop.f32.mrb[0].mxu0
    %v626 = vadd.f32 %v586, %v625
    %v627 = vpop.f32.mrb[0].mxu0
    %v628 = vpop.f32.mrb[0].mxu0
    %v629 = vpop.f32.mrb[0].mxu0
    %630 = vdwg.mxu0
    %631 = vmatprep.subr.bf16.mxu0 0
    %632 = vmatpush1.bf16.msra.mxu0 %v481
    %633 = vmatprep.subr.bf16.mxu0 0
    %634 = vmatpush1.bf16.msra.mxu0 %v482
    %635 = vmatprep.subr.bf16.mxu0 0
    %636 = vmatpush1.bf16.msra.mxu0 %v483
    %637 = vmatprep.subr.bf16.mxu0 0
    %638 = vmatpush1.bf16.msra.mxu0 %v484
    %639 = vmatprep.subr.bf16.mxu0 0
    %640 = vmatpush1.bf16.msra.mxu0 %v485
    %641 = vmatprep.subr.bf16.mxu0 0
    %642 = vmatpush1.bf16.msra.mxu0 %v486
    %643 = vmatprep.subr.bf16.mxu0 0
    %644 = vmatpush1.bf16.msra.mxu0 %v487
    %645 = vmatprep.subr.bf16.mxu0 0
    %646 = vmatpush1.bf16.msra.mxu0 %v488
    %647 = vmatprep.subr.bf16.mxu0 0
    %648 = vmatpush1.bf16.msra.mxu0 %v489
    %649 = vmatprep.subr.bf16.mxu0 0
    %650 = vmatpush1.bf16.msra.mxu0 %v490
    %651 = vmatprep.subr.bf16.mxu0 0
    %652 = vmatpush1.bf16.msra.mxu0 %v491
    %653 = vmatprep.subr.bf16.mxu0 0
    %654 = vmatpush1.bf16.msra.mxu0 %v492
    %655 = vmatprep.subr.bf16.mxu0 0
    %656 = vmatpush1.bf16.msra.mxu0 %v493
    %657 = vmatprep.subr.bf16.mxu0 0
    %658 = vmatpush1.bf16.msra.mxu0 %v494
    %659 = vmatprep.subr.bf16.mxu0 0
    %660 = vmatpush1.bf16.msra.mxu0 %v495
    %661 = vmatprep.subr.bf16.mxu0 0
    %662 = vmatpush1.bf16.msra.mxu0 %v496
    %663 = vmatprep.mubr.bf16.mxu0 %v146
    %664 = vmatmul.mubr.bf16.gmra.mrb[0].mxu0 %v145
    %v665 = vpop.f32.mrb[0].mxu0
    %v666 = vadd.f32 %v626, %v665
    %v667 = vpop.f32.mrb[0].mxu0
    %v668 = vpop.f32.mrb[0].mxu0
    %v669 = vpop.f32.mrb[0].mxu0
    %670 = vdwg.mxu0
    %671 = vmatprep.subr.bf16.mxu0 0
    %672 = vmatpush1.bf16.msra.mxu0 %v497
    %673 = vmatprep.subr.bf16.mxu0 0
    %674 = vmatpush1.bf16.msra.mxu0 0
    %675 = vmatprep.subr.bf16.mxu0 0
    %676 = vmatpush1.bf16.msra.mxu0 0
    %677 = vmatprep.subr.bf16.mxu0 0
    %678 = vmatpush1.bf16.msra.mxu0 0
    %679 = vmatprep.subr.bf16.mxu0 0
    %680 = vmatpush1.bf16.msra.mxu0 0
    %681 = vmatprep.subr.bf16.mxu0 0
    %682 = vmatpush1.bf16.msra.mxu0 0
    %683 = vmatprep.subr.bf16.mxu0 0
    %684 = vmatpush1.bf16.msra.mxu0 0
    %685 = vmatprep.subr.bf16.mxu0 0
    %686 = vmatpush1.bf16.msra.mxu0 0
    %687 = vmatprep.subr.bf16.mxu0 0
    %688 = vmatpush1.bf16.msra.mxu0 0
    %689 = vmatprep.subr.bf16.mxu0 0
    %690 = vmatpush1.bf16.msra.mxu0 0
    %691 = vmatprep.subr.bf16.mxu0 0
    %692 = vmatpush1.bf16.msra.mxu0 0
    %693 = vmatprep.subr.bf16.mxu0 0
    %694 = vmatpush1.bf16.msra.mxu0 0
    %695 = vmatprep.subr.bf16.mxu0 0
    %696 = vmatpush1.bf16.msra.mxu0 0
    %697 = vmatprep.subr.bf16.mxu0 0
    %698 = vmatpush1.bf16.msra.mxu0 0
    %699 = vmatprep.subr.bf16.mxu0 0
    %700 = vmatpush1.bf16.msra.mxu0 0
    %701 = vmatprep.subr.bf16.mxu0 0
    %702 = vmatpush1.bf16.msra.mxu0 0
    %703 = vmatprep.mubr.bf16.mxu0 0
    %704 = vmatmul.mubr.bf16.gmra.mrb[0].mxu0 %v549
    %v705 = vpop.f32.mrb[0].mxu0
    %v706 = vadd.f32 %v666, %v705
    %v707 = vpop.f32.mrb[0].mxu0
    %v708 = vpop.f32.mrb[0].mxu0
    %v709 = vpop.f32.mrb[0].mxu0
    %710 = vdwg.mxu0
    %v711 = vmax.f32 %v706, 0.0
    %v712 = vld [vmem:[%s3] sm:$0x1]
    %v714 = vlaneseq
    %v715 = vshrl.u32 %v714, 7
    %v716 = vsub.s32 0, %v715
    %v717 = vrot.slane %v712, %v716
    %v719 = vadd.f32 %v711, %v717
    %720 = vmax.xlane.f32.xlu0 %v719
    %v721 = vpop.xlane.xlu0 %720
    %v722 = vsub.f32 %v719, %v721
    %v723 = vmul.f32 %v722, 1.442695
    %v724 = vpow.pop %v723
    %725 = vadd.xlane.f32.xlu0 %v724
    %v726 = vpop.xlane.xlu0 %725
    %v727 = vlog2.pop %v726
    %v728 = vmul.f32 %v727, 0.6931472
    %v729 = vsub.f32 %v722, %v728
    %vm730 = vcmask 261120
    %731 = vst.msk [vmem:[#allocation7] sm:$0xff] %vm730, %v729
    // Predicated region
    $region26: #{tpu_custom_call.1} parent=1 // pred_check
      _
    $region27: #{tpu_custom_call.1} parent=1 // pred_check_branch
      %733 = sbr.rel (0) target = $region29
    $region28: #{tpu_custom_call.1} parent=1 // pred_region
      %s735 = ssub.s32 128, 32
      %736 = vsyncadd [#allocation4], %s735
      %s737 = sshll.u32 [#allocation7], 4
      %s738 = int_to_ptr.vmem [resolvable:$true] %s737
      %743 = dma.vmem_to_hbm [thread:$0]  %s738, 32, %s4, [#allocation4], 32, 32, 2
    $region29: #{tpu_custom_call.1} parent=1 // pred_fallthru
      _
    // Predicated region
    $region30: #{tpu_custom_call.1} parent=1 // pred_check
      _
    $region31: #{tpu_custom_call.1} parent=1 // pred_check_branch
      %745 = sbr.rel (0) target = $region33
    $region32: #{tpu_custom_call.1} parent=1 // pred_region
      %746 = dma.done [#allocation4], 128
    $region33: #{tpu_custom_call.1} parent=1 // pred_fallthru
      _
    %747 = vsyncpa [#allocation3], 1
    %748 = vsyncpa [#allocation6], 1
    %749 = vsyncpa [#allocation4], 1

</llo_original>
